<compile_context>
chip_gen: v5e
topology: v5e:2x2
jax: 0.10.0
libtpu: 0.0.40
codegen_flags: <defaults>
</compile_context>

<pallas_src>
import numpy as np
from functools import reduce
from operator import mul

import jax
import jax.numpy as jnp
from jax.experimental import pallas as pl
from jax.experimental.pallas import tpu as pltpu


# ----------------------------- Pallas kernel ------------------------------ #

def _limited_attention_kernel(ktiles_ref, counts_ref, x_ref, wt_ref, b_ref,
                              out_ref):
    # Grid: (neuron_tiles, max_occupied_ktiles)   -- reduction (j) axis last.
    # ktiles_ref: SMEM (n_nt * max_nk,) int32  occupied-k-tile list (padded)
    # counts_ref: SMEM (n_nt,)          int32  #occupied k-tiles per neuron tile
    # x_ref:   (B,  tk)  f32   input F-slice for the current k-tile
    # wt_ref:  (tk, tn)  f32   pre-tiled dense scattered-weight tile
    # b_ref:   (1,  tn)  f32   bias tile
    # out_ref: (B,  tn)  f32   resident across j -> accumulate in place
    n = pl.program_id(0)
    j = pl.program_id(1)

    @pl.when(j == 0)
    def _init():
        # Fold the bias into the accumulator init (no finalize pass needed).
        out_ref[...] = jnp.broadcast_to(b_ref[...], out_ref.shape)

    @pl.when(j < counts_ref[n])
    def _accum():
        out_ref[...] += jnp.dot(x_ref[...], wt_ref[...],
                                preferred_element_type=jnp.float32)


def limited_attention_forward(x, blocked_wt, bias, ktiles, counts, max_nk,
                              input_shape, output_shape,
                              *, vmem_limit_bytes=32 * 1024 * 1024):
    """Forward pass.

    x:          (B, *input_shape) or (*input_shape)  (matches the torch module)
    blocked_wt: (F//tk, N//tn, tk, tn) pre-tiled dense scattered weights
    bias:       (N,)
    ktiles:     (n_nt * max_nk,) int32  per-neuron-tile occupied k-tile list
    counts:     (n_nt,)          int32  #occupied k-tiles per neuron tile
    Returns     (B, *output_shape)
    """
    n_kt, n_nt, tk, tn = blocked_wt.shape
    F = n_kt * tk
    N = n_nt * tn

    B = 1 if tuple(x.shape) == tuple(input_shape) else x.shape[0]
    x_flat = x.reshape(B, F).astype(jnp.float32)
    bias2d = bias.reshape(1, N).astype(jnp.float32)

    grid = (n_nt, max_nk)

    # index_maps receive (grid indices..., *scalar-prefetch refs) positionally.
    # TODO(synk): for large B, hold x fully resident (or add a B grid axis) to
    # avoid re-streaming the (B, F) input once per neuron tile; irrelevant at B<=2.
    def x_map(n, j, kt, cnt):
        return (0, kt[n * max_nk + j])

    def w_map(n, j, kt, cnt):
        return (kt[n * max_nk + j], n, 0, 0)

    def b_map(n, j, kt, cnt):
        return (0, n)

    def o_map(n, j, kt, cnt):
        return (0, n)

    out = pl.pallas_call(
        _limited_attention_kernel,
        out_shape=jax.ShapeDtypeStruct((B, N), jnp.float32),
        grid_spec=pltpu.PrefetchScalarGridSpec(
            num_scalar_prefetch=2,
            grid=grid,
            in_specs=[
                pl.BlockSpec((B, tk), x_map),                 # x F-slice
                pl.BlockSpec((None, None, tk, tn), w_map),    # contiguous weight tile
                pl.BlockSpec((1, tn), b_map),                 # bias tile
            ],
            out_specs=pl.BlockSpec((B, tn), o_map),
        ),
        compiler_params=pltpu.CompilerParams(
            dimension_semantics=("parallel", "arbitrary"),
            # Safe on every generation (v7x physical VMEM = 64 MiB); actual use
            # here is far below this.  Raise tile caps + this limit on v5e/v6e.
            vmem_limit_bytes=vmem_limit_bytes),
    )(ktiles, counts, x_flat, blocked_wt, bias2d)

    return out.reshape(B, *output_shape)


# -------------------- init-time parameter preparation --------------------- #

def _pick_tile(total, cap, align=128):
    """Largest multiple of `align` that divides `total` and is <= cap; falls
    back to the full extent when `total` is small or not align-divisible."""
    if total <= cap:
        return total
    if total % align != 0:
        return total
    best = align
    t = align
    while t <= cap:
        if total % t == 0:
            best = t
        t += align
    return best


def build_blocked_sparse_params(connections_index, weights, input_shape,
                                output_shape, *, tk=None, tn=None):
    """Fold the static connection indices + focus weights into a dense,
    pre-tiled (F//tk, N//tn, tk, tn) weight array and build the block-sparsity
    metadata (occupied k-tiles per neuron tile).  Done ONCE at init (re-run
    only when `weights` is updated), never per call."""
    F = int(np.prod(input_shape))
    N, K = connections_index.shape
    if tk is None:
        tk = _pick_tile(F, 512)    # k-tile cap; can be raised on v5e/v6e
    if tn is None:
        tn = _pick_tile(N, 128)    # keeps parallel neuron axis extent >= 2
    assert F % tk == 0 and N % tn == 0
    n_kt, n_nt = F // tk, N // tn

    # Dense scatter: W[f, n] = sum_k weights[n, k] * [connections_index[n,k]==f]
    rows = jnp.broadcast_to(
        jnp.arange(N, dtype=jnp.int32)[:, None], (N, K)).reshape(-1)
    cols = connections_index.reshape(-1).astype(jnp.int32)
    dense = jnp.zeros((F, N), jnp.float32).at[cols, rows].add(
        weights.reshape(-1).astype(jnp.float32))

    # Pre-tiled contiguous layout: one contiguous DMA per (tk, tn) tile.
    blocked = jnp.transpose(dense.reshape(n_kt, tk, n_nt, tn), (0, 2, 1, 3))

    # Tile occupancy from the STATIC indices (independent of weight values).
    ci = np.asarray(jax.device_get(connections_index)).astype(np.int64)
    kt_of_conn = (ci // tk).reshape(-1)                  # (N*K,)
    nt_of_conn = np.repeat(np.arange(N) // tn, K)        # (N*K,)
    occ = np.zeros((n_nt, n_kt), dtype=bool)
    occ[nt_of_conn, kt_of_conn] = True                   # every row has >=1 True

    counts = occ.sum(axis=1).astype(np.int32)
    max_nk = int(counts.max())
    ktiles = np.zeros((n_nt, max_nk), np.int32)
    for nt in range(n_nt):
        kts = np.flatnonzero(occ[nt]).astype(np.int32)
        ktiles[nt, :len(kts)] = kts
        # Pad with the last valid tile: the block index repeats on padded grid
        # steps, so Pallas issues no extra DMA; the matmul is gated off.
        ktiles[nt, len(kts):] = kts[-1]

    # 1-D SMEM layout avoids 2-D SMEM lane padding blowup.
    return (blocked, jnp.asarray(ktiles.reshape(-1)), jnp.asarray(counts),
            max_nk)


def get_connections_index_jax(key, input_shape, neurons, focus, intensity=1):
    """JAX re-implementation of get_connections_index (init-time glue).
    # TODO(synk): not bit-identical to torch RNG (randint/randn streams differ)."""
    ndim = len(input_shape)
    flat_len = int(reduce(mul, input_shape))
    k_centers, k_noise = jax.random.split(key)

    centers = jax.random.randint(k_centers, (neurons,), 0, flat_len)
    multi = jnp.stack(jnp.unravel_index(centers, input_shape), axis=1)
    multi = multi.astype(jnp.float32)
    multi_sorted = jnp.sort(multi, axis=0)                       # per-column sort
    repeated = jnp.tile(multi_sorted, (1, focus))                # (N, ndim*focus)

    sigma = float(np.sqrt(focus) / 2.0)
    rel = intensity * sigma * jax.random.normal(k_noise, repeated.shape)
    conn = (repeated + rel).reshape(neurons, focus, ndim)

    max_vals = jnp.asarray(input_shape, jnp.float32) - 1.0
    conn = jnp.clip(conn, 0.0, max_vals)
    conn = jnp.round(conn).astype(jnp.int32)

    strides = np.array(
        [int(np.prod(input_shape[i + 1:])) for i in range(ndim)], np.int32)
    flat_idx = jnp.sum(conn * jnp.asarray(strides), axis=-1)     # (N, focus)
    return flat_idx.astype(jnp.int32)


def reference_forward(x, connections_index, weights, bias, output_shape):
    """Plain-JAX reference mirroring the PyTorch forward (gather based)."""
    B = x.shape[0]
    x_flat = x.reshape(B, -1)
    N, K = connections_index.shape
    sel = jnp.take(x_flat, connections_index.reshape(-1), axis=1).reshape(B, N, K)
    y = (sel * weights[None]).sum(-1) + bias[None]
    return y.reshape(B, *output_shape)


# ---------------------------------- main ----------------------------------- #

if __name__ == "__main__":
    input_shape = (4, 16, 16)       # (C, H, W)   -> F = 1024
    output_shape = (8, 32)          # neurons N = 256
    focus = 8
    batch = 2
    neurons = int(reduce(mul, output_shape))
    F = int(reduce(mul, input_shape))

    key = jax.random.PRNGKey(0)
    k_idx, k_w, k_b, k_x = jax.random.split(key, 4)

    connections_index = get_connections_index_jax(
        k_idx, input_shape, neurons, focus, intensity=1)
    weights = jax.random.normal(k_w, (neurons, focus), jnp.float32)
    bias = jax.random.normal(k_b, (neurons,), jnp.float32)
    x = jax.random.normal(k_x, (batch, *input_shape), jnp.float32)

    # Init-time hoist: dense scatter + contiguous tiling + block-sparsity lists.
    blocked_wt, ktiles, counts, max_nk = build_blocked_sparse_params(
        connections_index, weights, input_shape, output_shape)
    blocked_wt = jax.block_until_ready(blocked_wt)

    y = limited_attention_forward(
        x, blocked_wt, bias, ktiles, counts, max_nk, input_shape, output_shape)
    y = jax.block_until_ready(y)

    y_ref = reference_forward(x, connections_index, weights, bias, output_shape)
    assert y.shape == (batch, *output_shape)
    assert jnp.allclose(y, y_ref, atol=1e-4, rtol=1e-4), "mismatch vs reference"

    print("KERNEL_OK")
</pallas_src>

<mosaic_0001>
module attributes {stable_mosaic.version = 11 : i64} {
  func.func @_limited_attention_kernel(%arg0: i32, %arg1: i32, %arg2: memref<4xi32, #tpu.memory_space<smem>>, %arg3: memref<2xi32, #tpu.memory_space<smem>>, %arg4: memref<2x512xf32, #tpu.memory_space<vmem>>, %arg5: memref<1x1x512x128xf32, #tpu.memory_space<vmem>>, %arg6: memref<1x128xf32, #tpu.memory_space<vmem>>, %arg7: memref<2x128xf32, #tpu.memory_space<vmem>>) attributes {dimension_semantics = [#tpu.dimension_semantics<parallel>, #tpu.dimension_semantics<arbitrary>], iteration_bounds = array<i64: 2, 2>, scalar_prefetch = 2 : i64, scratch_operands = 0 : i64, tpu.core_type = #tpu.core_type<tc>, window_params = [{transform_indices = @transform_0, window_bounds = array<i64: 2, 512>}, {transform_indices = @transform_1, window_bounds = array<i64: 1, 1, 512, 128>}, {transform_indices = @transform_2, window_bounds = array<i64: 1, 128>}, {transform_indices = @transform_3, window_bounds = array<i64: 2, 128>}]} {
    %c0_i32 = arith.constant 0 : i32
    %0 = arith.cmpi eq, %arg1, %c0_i32 : i32
    %1 = arith.extui %0 : i1 to i32
    %c0_i32_0 = arith.constant 0 : i32
    %2 = arith.cmpi ne, %1, %c0_i32_0 : i32
    scf.if %2 {
      %c0 = arith.constant 0 : index
      %c0_2 = arith.constant 0 : index
      %8 = vector.load %arg6[%c0, %c0_2] : memref<1x128xf32, #tpu.memory_space<vmem>>, vector<1x128xf32>
      %9 = vector.shape_cast %8 : vector<1x128xf32> to vector<1x128xf32>
      %10 = vector.broadcast %9 : vector<1x128xf32> to vector<2x128xf32>
      %c0_3 = arith.constant 0 : index
      %c0_4 = arith.constant 0 : index
      %11 = vector.load %arg7[%c0_3, %c0_4] : memref<2x128xf32, #tpu.memory_space<vmem>>, vector<2x128xf32>
      tpu.vector_store %arg7[%c0_3, %c0_4], %10 {strides = array<i32>} : memref<2x128xf32, #tpu.memory_space<vmem>>, vector<2x128xf32>,
    } else {
    }
    %3 = arith.index_cast %arg0 : i32 to index
    %4 = memref.load %arg3[%3] : memref<2xi32, #tpu.memory_space<smem>>
    %5 = arith.cmpi slt, %arg1, %4 : i32
    %6 = arith.extui %5 : i1 to i32
    %c0_i32_1 = arith.constant 0 : i32
    %7 = arith.cmpi ne, %6, %c0_i32_1 : i32
    scf.if %7 {
      %c0 = arith.constant 0 : index
      %c0_2 = arith.constant 0 : index
      %8 = vector.load %arg7[%c0, %c0_2] : memref<2x128xf32, #tpu.memory_space<vmem>>, vector<2x128xf32>
      %c0_3 = arith.constant 0 : index
      %c0_4 = arith.constant 0 : index
      %9 = vector.load %arg4[%c0_3, %c0_4] : memref<2x512xf32, #tpu.memory_space<vmem>>, vector<2x512xf32>
      %c0_5 = arith.constant 0 : index
      %c0_6 = arith.constant 0 : index
      %c0_7 = arith.constant 0 : index
      %c0_8 = arith.constant 0 : index
      %10 = vector.load %arg5[%c0_5, %c0_6, %c0_7, %c0_8] : memref<1x1x512x128xf32, #tpu.memory_space<vmem>>, vector<1x1x512x128xf32>
      %11 = vector.shape_cast %10 : vector<1x1x512x128xf32> to vector<512x128xf32>
      %cst = arith.constant dense<0.000000e+00> : vector<2x128xf32>
      %12 = tpu.matmul %9, %11, %cst {dimension_numbers = #tpu.dot_dimension_numbers<[1], [0], [0], [1], [0, 0, 1, 1], [], []>} : vector<2x512xf32>, vector<512x128xf32>, vector<2x128xf32> -> vector<2x128xf32>
      %13 = arith.addf %8, %12 : vector<2x128xf32>
      %c0_9 = arith.constant 0 : index
      %c0_10 = arith.constant 0 : index
      %14 = vector.load %arg7[%c0_9, %c0_10] : memref<2x128xf32, #tpu.memory_space<vmem>>, vector<2x128xf32>
      tpu.vector_store %arg7[%c0_9, %c0_10], %13 {strides = array<i32>} : memref<2x128xf32, #tpu.memory_space<vmem>>, vector<2x128xf32>,
    } else {
    }
    return
  }
  func.func @transform_0(%arg0: i32, %arg1: i32, %arg2: memref<4xi32, #tpu.memory_space<smem>>, %arg3: memref<2xi32, #tpu.memory_space<smem>>) -> (i32, i32) {
    %c2_i32 = arith.constant 2 : i32
    %0 = arith.muli %arg0, %c2_i32 : i32
    %1 = arith.addi %0, %arg1 : i32
    %2 = arith.index_cast %1 : i32 to index
    %3 = memref.load %arg2[%2] : memref<4xi32, #tpu.memory_space<smem>>
    %c0_i32 = arith.constant 0 : i32
    %c0_i32_0 = arith.constant 0 : i32
    return %c0_i32, %3 : i32, i32
  }
  func.func @transform_1(%arg0: i32, %arg1: i32, %arg2: memref<4xi32, #tpu.memory_space<smem>>, %arg3: memref<2xi32, #tpu.memory_space<smem>>) -> (i32, i32, i32, i32) {
    %c2_i32 = arith.constant 2 : i32
    %0 = arith.muli %arg0, %c2_i32 : i32
    %1 = arith.addi %0, %arg1 : i32
    %2 = arith.index_cast %1 : i32 to index
    %3 = memref.load %arg2[%2] : memref<4xi32, #tpu.memory_space<smem>>
    %c0_i32 = arith.constant 0 : i32
    %c0_i32_0 = arith.constant 0 : i32
    %c0_i32_1 = arith.constant 0 : i32
    return %3, %arg0, %c0_i32, %c0_i32_0 : i32, i32, i32, i32
  }
  func.func @transform_2(%arg0: i32, %arg1: i32, %arg2: memref<4xi32, #tpu.memory_space<smem>>, %arg3: memref<2xi32, #tpu.memory_space<smem>>) -> (i32, i32) {
    %c0_i32 = arith.constant 0 : i32
    %c0_i32_0 = arith.constant 0 : i32
    return %c0_i32, %arg0 : i32, i32
  }
  func.func @transform_3(%arg0: i32, %arg1: i32, %arg2: memref<4xi32, #tpu.memory_space<smem>>, %arg3: memref<2xi32, #tpu.memory_space<smem>>) -> (i32, i32) {
    %c0_i32 = arith.constant 0 : i32
    %c0_i32_0 = arith.constant 0 : i32
    return %c0_i32, %arg0 : i32, i32
  }
}

</mosaic_0001>

<llo_original>
// kernel: tpu_custom_call.1
$region0: #{tpu_custom_call.1}
  #allocation0 [shape = 'u32[]', space=smem, size = 0x4, offset = 0x4, fixed_abs, tag = 'smem constant byte address 0x4 - core index']
  #allocation1 [shape = 'u32[72,128]{1,0:T(1,128)}', space=vmem, size = 0x9000, scoped, tag = 'internal scratch']
  #allocation2 [shape = 's32[1]{0}', space=sflag, size = 0x4, scoped, tag = 'scoped memory for tpu_custom_call.1']
  #allocation3 [shape = 'u8[512]{0}', space=smem, size = 0x200, scoped, tag = 'prefetched SMEM operand 0']
  #allocation4 [shape = 'u8[512]{0}', space=smem, size = 0x200, scoped, tag = 'prefetched SMEM operand 1']
  %s0 = inlined_call_operand.hbm [shape: s32[4], index: 0, kind: input, shape index: {}]
  %s1 = inlined_call_operand.hbm [shape: s32[2], index: 1, kind: input, shape index: {}]
  %s2 = inlined_call_operand.hbm [shape: f32[2,1024], index: 2, kind: input, shape index: {}]
  %s3 = inlined_call_operand.hbm [shape: f32[2,2,512,128], index: 3, kind: input, shape index: {}]
  %s4 = inlined_call_operand.vmem [shape: f32[1,256], index: 4, kind: input, shape index: {}]
  %s5 = inlined_call_operand.hbm [shape: f32[2,256], index: 5, kind: output, shape index: {}]
  %s6 = sld [smem:[#allocation0]]
  $region61: #{tpu_custom_call.1} parent=0
    _
  %s8 = ssub.s32 1, %s6
  %s9 = scalar_select 0, %s8, %s6
  %s11 = sshll.u32 %s0, 4
  %s12 = int_to_ptr.hbm [resolvable:$true] %s11
  %14 = dma.hbm_to_smem %s12, 16, [#allocation3], [#allocation2]
  %s16 = sshll.u32 %s1, 4
  %s17 = int_to_ptr.hbm [resolvable:$true] %s16
  %19 = dma.hbm_to_smem %s17, 16, [#allocation4], [#allocation2]
  %21 = dma.done [#allocation2], 32
  %22 = sfence
  $region1: #{tpu_custom_call.1} parent=0
    #allocation5 [shape = 'u8[8192]{0}', space=vmem, size = 0x2000, scoped, tag = 'input window, operand 2']
    #allocation6 [shape = 's32[2]{0}', space=sflag, size = 0x8, scoped, tag = 'scoped memory for tpu_custom_call.1']
    #allocation7 [shape = 's32[2]{0}', space=sflag, size = 0x8, scoped, tag = 'scoped memory for tpu_custom_call.1']
    #allocation8 [shape = 'u8[524288]{0}', space=vmem, size = 0x80000, scoped, tag = 'input window, operand 3']
    #allocation9 [shape = 's32[2]{0}', space=sflag, size = 0x8, scoped, tag = 'scoped memory for tpu_custom_call.1']
    #allocation10 [shape = 'u8[2048]{0}', space=vmem, size = 0x800, scoped, tag = 'output window, operand 0']
    %23 = vsyncpa [#allocation6], 0
    %s24 = scalar_lea.sflag [#allocation6], 1
    %25 = vsyncpa %s24, 0
    %26 = vsyncpa [#allocation9], 0
    %s27 = scalar_lea.sflag [#allocation9], 1
    %28 = vsyncpa %s27, 0
    %29 = vsyncpa [#allocation7], 0
    %s30 = scalar_lea.sflag [#allocation7], 1
    %31 = vsyncpa %s30, 0
    loop: start=0, step=1, limit=6
    $region2: #{tpu_custom_call.1} parent=1 // loop_pre_header
      _
    $region3: #{tpu_custom_call.1} parent=1 // loop_header
      %s33 = sphi 0, %s37
      %p34 = scmp.ge.s32.totalorder %s33, 6
      %s40 = sphi 0, %s52
      %s41 = sphi 0, %s48
      %s42 = sphi 0, %s40
      %s43 = sphi 0, %s41
      %s44 = sphi 0, %s42
      %s45 = sphi 0, %s43
      %s61 = sphi 0, %s63
      %s64 = sphi 0, %s61
      %s65 = sphi 0, %s64
      %s81 = sphi 0, %s65
      %s95 = sphi 0, %s97
      %s98 = sphi 0, %s95
      %s99 = sphi 0, %s98
      %s115 = sphi 0, %s99
      %s121 = sphi 0, %s123
      %s124 = sphi 0, %s121
      %s125 = sphi 0, %s124
      %s141 = sphi 0, %s125
      %s147 = sphi 0, %s149
      %s150 = sphi 0, %s147
      %s151 = sphi 0, %s150
      %s167 = sphi 0, %s151
    $region4: #{tpu_custom_call.1} parent=1 // loop_header_branch
      %36 = sbr.rel (%p34) target = $region8
    $region5: #{tpu_custom_call.1} parent=1 // loop_body
      %s38 = ssub.s32 %s33, 1
      %s39 = ssub.s32 %s33, 2
      %s46 = sadd.s32 1, %s41
      %p47 = scmp.ge.s32.totalorder %s46, 2
      %s48 = scalar_select %p47, 0, %s46
      %s49 = sadd.s32 1, %s40
      %s50 = scalar_select %p47, %s49, %s40
      %p51 = scmp.ge.s32.totalorder %s50, 2
      %s52 = scalar_select %p51, 0, %s50
      %s53 = smul.u32 %s40, 2
      %s54 = sadd.s32 %s53, %s41
      %s55 = sld [smem:[#allocation3 + %s54]]
      %s56 = smul.u32 %s52, 2
      %s57 = sadd.s32 %s56, %s48
      %s58 = sld [smem:[#allocation3 + %s57]]
      %s59 = ssub.s32 %s55, %s58
      %p60 = scmp.eq.s32.totalorder %s59, 0
      %s62 = sadd.s32 %s61, 1
      %s63 = scalar_select %p60, %s61, %s62
      %p66 = pneg %p60
      %p67 = scmp.eq.s32.totalorder %s33, 3
      %p68 = por %p66, %p67
      %p69 = scmp.ne.s32.totalorder %s61, %s64
      %p70 = scmp.eq.s32.totalorder %s33, 0
      %p71 = por %p69, %p70
      %p72 = scmp.ne.s32.totalorder %s61, %s64
      %p73 = scmp.eq.s32.totalorder %s38, 3
      %p74 = por %p72, %p73
      %p75 = scmp.ne.s32.totalorder %s64, %s65
      %p76 = scmp.eq.s32.totalorder %s38, 0
      %p77 = por %p75, %p76
      %p78 = scmp.ne.s32.totalorder %s64, %s65
      %p79 = scmp.eq.s32.totalorder %s39, 3
      %p80 = por %p78, %p79
      %p82 = scmp.ne.s32.totalorder %s65, %s81
      %p83 = scmp.eq.s32.totalorder %s39, 0
      %p84 = por %p82, %p83
      %s85 = smul.u32 %s40, 2
      %s86 = sadd.s32 %s85, %s41
      %s87 = sld [smem:[#allocation3 + %s86]]
      %s88 = smul.u32 %s52, 2
      %s89 = sadd.s32 %s88, %s48
      %s90 = sld [smem:[#allocation3 + %s89]]
      %s91 = ssub.s32 %s87, %s90
      %s92 = ssub.s32 %s40, %s52
      %s93 = sor.u32 %s91, %s92
      %p94 = scmp.eq.s32.totalorder %s93, 0
      %s96 = sadd.s32 %s95, 1
      %s97 = scalar_select %p94, %s95, %s96
      %p100 = pneg %p94
      %p101 = scmp.eq.s32.totalorder %s33, 3
      %p102 = por %p100, %p101
      %p103 = scmp.ne.s32.totalorder %s95, %s98
      %p104 = scmp.eq.s32.totalorder %s33, 0
      %p105 = por %p103, %p104
      %p106 = scmp.ne.s32.totalorder %s95, %s98
      %p107 = scmp.eq.s32.totalorder %s38, 3
      %p108 = por %p106, %p107
      %p109 = scmp.ne.s32.totalorder %s98, %s99
      %p110 = scmp.eq.s32.totalorder %s38, 0
      %p111 = por %p109, %p110
      %p112 = scmp.ne.s32.totalorder %s98, %s99
      %p113 = scmp.eq.s32.totalorder %s39, 3
      %p114 = por %p112, %p113
      %p116 = scmp.ne.s32.totalorder %s99, %s115
      %p117 = scmp.eq.s32.totalorder %s39, 0
      %p118 = por %p116, %p117
      %s119 = ssub.s32 %s40, %s52
      %p120 = scmp.eq.s32.totalorder %s119, 0
      %s122 = sadd.s32 %s121, 1
      %s123 = scalar_select %p120, %s121, %s122
      %p126 = pneg %p120
      %p127 = scmp.eq.s32.totalorder %s33, 3
      %p128 = por %p126, %p127
      %p129 = scmp.ne.s32.totalorder %s121, %s124
      %p130 = scmp.eq.s32.totalorder %s33, 0
      %p131 = por %p129, %p130
      %p132 = scmp.ne.s32.totalorder %s121, %s124
      %p133 = scmp.eq.s32.totalorder %s38, 3
      %p134 = por %p132, %p133
      %p135 = scmp.ne.s32.totalorder %s124, %s125
      %p136 = scmp.eq.s32.totalorder %s38, 0
      %p137 = por %p135, %p136
      %p138 = scmp.ne.s32.totalorder %s124, %s125
      %p139 = scmp.eq.s32.totalorder %s39, 3
      %p140 = por %p138, %p139
      %p142 = scmp.ne.s32.totalorder %s125, %s141
      %p143 = scmp.eq.s32.totalorder %s39, 0
      %p144 = por %p142, %p143
      %s145 = ssub.s32 %s40, %s52
      %p146 = scmp.eq.s32.totalorder %s145, 0
      %s148 = sadd.s32 %s147, 1
      %s149 = scalar_select %p146, %s147, %s148
      %p152 = pneg %p146
      %p153 = scmp.eq.s32.totalorder %s33, 3
      %p154 = por %p152, %p153
      %p155 = scmp.ne.s32.totalorder %s147, %s150
      %p156 = scmp.eq.s32.totalorder %s33, 0
      %p157 = por %p155, %p156
      %p158 = scmp.ne.s32.totalorder %s147, %s150
      %p159 = scmp.eq.s32.totalorder %s38, 3
      %p160 = por %p158, %p159
      %p161 = scmp.ne.s32.totalorder %s150, %s151
      %p162 = scmp.eq.s32.totalorder %s38, 0
      %p163 = por %p161, %p162
      %p164 = scmp.ne.s32.totalorder %s150, %s151
      %p165 = scmp.eq.s32.totalorder %s39, 3
      %p166 = por %p164, %p165
      %p168 = scmp.ne.s32.totalorder %s151, %s167
      %p169 = scmp.eq.s32.totalorder %s39, 0
      %p170 = por %p168, %p169
      %p171 = scmp.le.s32.totalorder 1, %s33
      %p172 = scmp.lt.s32.totalorder %s33, 5
      %p173 = pnand %p171, %p172
      %p174 = pneg %p173
      // Predicated region
      $region9: #{tpu_custom_call.1} parent=5 // pred_check
        _
      $region10: #{tpu_custom_call.1} parent=5 // pred_check_branch
        %176 = sbr.rel (%p173) target = $region12
      $region11: #{tpu_custom_call.1} parent=5 // pred_region
        %s177 = ssub.s32 %s33, 1
      $region12: #{tpu_custom_call.1} parent=5 // pred_fallthru
        _
      %p178 = scmp.lt.s32.totalorder %s33, 4
      // Predicated region
      $region13: #{tpu_custom_call.1} parent=5 // pred_check
        %p179 = pneg %p178
      $region14: #{tpu_custom_call.1} parent=5 // pred_check_branch
        %181 = sbr.rel (%p179) target = $region16
      $region15: #{tpu_custom_call.1} parent=5 // pred_region
        // Predicated region
        $region17: #{tpu_custom_call.1} parent=15 // pred_check
          %p182 = pneg %p71
        $region18: #{tpu_custom_call.1} parent=15 // pred_check_branch
          %184 = sbr.rel (%p182) target = $region20
        $region19: #{tpu_custom_call.1} parent=15 // pred_region
          %s185 = sand.u32 %s61, 1
          %s186 = scalar_lea.sflag [#allocation6], %s185
          %s187 = sand.u32 %s61, 1
          %s188 = smul.addr %s187, 8
          %s189 = scalar_lea.vmem [#allocation5], %s188
          %s190 = smul.u32 %s40, 2
          %s191 = sadd.s32 %s190, %s41
          %s192 = sld [smem:[#allocation3 + %s191]]
          %s193 = smul.u32 4, %s192
          %195 = vsyncadd %s186, 0
          %s196 = smul.addr %s193, 2
          %s197 = scalar_lea.hbm %s2, %s196
          %s199 = sshll.u32 %s197, 4
          %s200 = int_to_ptr.hbm [resolvable:$true] %s199
          %s201 = sshll.u32 %s189, 4
          %s202 = int_to_ptr.vmem [resolvable:$true] %s201
          %204 = dma.hbm_to_vmem [thread:$0]  %s200, 128, %s202, %s186
        $region20: #{tpu_custom_call.1} parent=15 // pred_fallthru
          _
        // Predicated region
        $region21: #{tpu_custom_call.1} parent=15 // pred_check
          %p205 = pneg %p105
        $region22: #{tpu_custom_call.1} parent=15 // pred_check_branch
          %207 = sbr.rel (%p205) target = $region24
        $region23: #{tpu_custom_call.1} parent=15 // pred_region
          %s208 = sand.u32 %s95, 1
          %s209 = scalar_lea.sflag [#allocation9], %s208
          %s210 = sand.u32 %s95, 1
          %s211 = smul.addr %s210, 512
          %s212 = scalar_lea.vmem [#allocation8], %s211
          %s213 = smul.u32 %s40, 2
          %s214 = sadd.s32 %s213, %s41
          %s215 = sld [smem:[#allocation3 + %s214]]
          %217 = vsyncadd %s209, 0
          %s218 = smul.addr %s40, 64
          %s219 = smul.addr %s215, 128
          %s220 = sadd.s32 %s218, %s219
          %s221 = smul.addr %s220, 8
          %s222 = scalar_lea.hbm %s3, %s221
          %s223 = sshll.u32 %s222, 4
          %s224 = int_to_ptr.hbm [resolvable:$true] %s223
          %s225 = sshll.u32 %s212, 4
          %s226 = int_to_ptr.vmem [resolvable:$true] %s225
          %231 = dma.hbm_to_vmem [thread:$0]  %s224, 8192, %s226, %s209, 128, 128, 8
        $region24: #{tpu_custom_call.1} parent=15 // pred_fallthru
          _
        // Predicated region
        $region25: #{tpu_custom_call.1} parent=15 // pred_check
          %p232 = pneg %p131
        $region26: #{tpu_custom_call.1} parent=15 // pred_check_branch
          %234 = sbr.rel (%p232) target = $region28
        $region27: #{tpu_custom_call.1} parent=15 // pred_region
          %p235 = scmp.lt.s32.totalorder %s40, 1
          %s236 = scalar_select %p235, %s40, 1
          %s237 = scalar_lea.vmem %s4, %s236
        $region28: #{tpu_custom_call.1} parent=15 // pred_fallthru
          _
      $region16: #{tpu_custom_call.1} parent=5 // pred_fallthru
        _
      %p238 = scmp.le.s32.totalorder 1, %s33
      %p239 = scmp.lt.s32.totalorder %s33, 5
      %p240 = pnand %p238, %p239
      %p241 = pneg %p240
      // Predicated region
      $region29: #{tpu_custom_call.1} parent=5 // pred_check
        _
      $region30: #{tpu_custom_call.1} parent=5 // pred_check_branch
        %243 = sbr.rel (%p240) target = $region32
      $region31: #{tpu_custom_call.1} parent=5 // pred_region
        %s244 = ssub.s32 %s33, 1
        %s245 = sand.u32 %s64, 1
        %s246 = scalar_lea.sflag [#allocation6], %s245
        %s247 = sand.u32 %s64, 1
        %s248 = smul.addr %s247, 8
        %s249 = scalar_lea.vmem [#allocation5], %s248
        // Predicated region
        $region33: #{tpu_custom_call.1} parent=31 // pred_check
          %p250 = pneg %p77
        $region34: #{tpu_custom_call.1} parent=31 // pred_check_branch
          %252 = sbr.rel (%p250) target = $region36
        $region35: #{tpu_custom_call.1} parent=31 // pred_region
          %254 = dma.done %s246, 128
        $region36: #{tpu_custom_call.1} parent=31 // pred_fallthru
          _
        %s255 = sand.u32 %s98, 1
        %s256 = scalar_lea.sflag [#allocation9], %s255
        %s257 = sand.u32 %s98, 1
        %s258 = smul.addr %s257, 512
        %s259 = scalar_lea.vmem [#allocation8], %s258
        // Predicated region
        $region37: #{tpu_custom_call.1} parent=31 // pred_check
          %p260 = pneg %p111
        $region38: #{tpu_custom_call.1} parent=31 // pred_check_branch
          %262 = sbr.rel (%p260) target = $region40
        $region39: #{tpu_custom_call.1} parent=31 // pred_region
          %264 = dma.done %s256, 8192
        $region40: #{tpu_custom_call.1} parent=31 // pred_fallthru
          _
        %s265 = sand.u32 %s64, 1
        %s266 = scalar_lea.sflag [#allocation6], %s265
        %s267 = sand.u32 %s64, 1
        %s268 = smul.addr %s267, 8
        %s269 = scalar_lea.vmem [#allocation5], %s268
        %p270 = pneg %p77
        %p271 = pneg %p74
        %s272 = sand.u32 %s98, 1
        %s273 = scalar_lea.sflag [#allocation9], %s272
        %s274 = sand.u32 %s98, 1
        %s275 = smul.addr %s274, 512
        %s276 = scalar_lea.vmem [#allocation8], %s275
        %p277 = pneg %p111
        %p278 = pneg %p108
        %p279 = scmp.lt.s32.totalorder %s42, 1
        %s280 = scalar_select %p279, %s42, 1
        %s281 = scalar_lea.vmem %s4, %s280
        %p282 = pneg %p137
        %p283 = pneg %p134
        %p284 = pneg %p163
        %p285 = pneg %p160
        %s286 = sand.u32 %s150, 1
        %s287 = scalar_lea.sflag [#allocation7], %s286
        %s288 = sand.u32 %s150, 1
        %s289 = smul.addr %s288, 2
        %s290 = scalar_lea.vmem [#allocation10], %s289
        %s291 = smul.u32 %s42, 2
        %s292 = sadd.s32 %s291, %s43
        %s293 = sld [smem:[#allocation3 + %s292]]
        %s294 = smul.u32 4, %s293
        %s295 = smul.u32 %s42, 2
        %s296 = sadd.s32 %s295, %s43
        %s297 = sld [smem:[#allocation3 + %s296]]
        %p298 = scmp.lt.s32.totalorder %s42, 1
        %s299 = scalar_select %p298, %s42, 1
        %s300 = scalar_lea.vmem %s4, %s299
        %p301 = scmp.eq.s32.totalorder %s43, 0
        // Predicated region
        $region41: #{tpu_custom_call.1} parent=31 // pred_check
          %p302 = pneg %p301
        $region42: #{tpu_custom_call.1} parent=31 // pred_check_branch
          %304 = sbr.rel (%p302) target = $region44
        $region43: #{tpu_custom_call.1} parent=31 // pred_region
          %v305 = vld [vmem:[%s300] sm:$0x1]
          %v307 = vperm.slane %v305, 0
          %309 = vst [vmem:[%s290] sm:$0x3] %v307
        $region44: #{tpu_custom_call.1} parent=31 // pred_fallthru
          _
        %s310 = sld [smem:[#allocation4 + %s42]]
        %p311 = scmp.lt.s32.totalorder %s43, %s310
        // Predicated region
        $region45: #{tpu_custom_call.1} parent=31 // pred_check
          %p312 = pneg %p311
        $region46: #{tpu_custom_call.1} parent=31 // pred_check_branch
          %314 = sbr.rel (%p312) target = $region48
        $region47: #{tpu_custom_call.1} parent=31 // pred_region
          %v315 = vld [vmem:[%s290] sm:$0x3]
          %v316 = vld [vmem:[%s249] sm:$0xff]
          %v317 = vld [vmem:[%s259] sm:$0xff]
          %v318 = vld [vmem:[%s259 + $0x8] sm:$0xff]
          %v319 = vld [vmem:[%s259 + $0x10] sm:$0xff]
          %v320 = vld [vmem:[%s259 + $0x18] sm:$0xff]
          %v321 = vld [vmem:[%s259 + $0x20] sm:$0xff]
          %v322 = vld [vmem:[%s259 + $0x28] sm:$0xff]
          %v323 = vld [vmem:[%s259 + $0x30] sm:$0xff]
          %v324 = vld [vmem:[%s259 + $0x38] sm:$0xff]
          %v325 = vld [vmem:[%s259 + $0x40] sm:$0xff]
          %v326 = vld [vmem:[%s259 + $0x48] sm:$0xff]
          %v327 = vld [vmem:[%s259 + $0x50] sm:$0xff]
          %v328 = vld [vmem:[%s259 + $0x58] sm:$0xff]
          %v329 = vld [vmem:[%s259 + $0x60] sm:$0xff]
          %v330 = vld [vmem:[%s259 + $0x68] sm:$0xff]
          %v331 = vld [vmem:[%s259 + $0x70] sm:$0xff]
          %v332 = vld [vmem:[%s259 + $0x78] sm:$0xff]
          %v333 = vld [vmem:[%s259 + $0x80] sm:$0xff]
          %v334 = vld [vmem:[%s259 + $0x88] sm:$0xff]
          %v335 = vld [vmem:[%s259 + $0x90] sm:$0xff]
          %v336 = vld [vmem:[%s259 + $0x98] sm:$0xff]
          %v337 = vld [vmem:[%s259 + $0xa0] sm:$0xff]
          %v338 = vld [vmem:[%s259 + $0xa8] sm:$0xff]
          %v339 = vld [vmem:[%s259 + $0xb0] sm:$0xff]
          %v340 = vld [vmem:[%s259 + $0xb8] sm:$0xff]
          %v341 = vld [vmem:[%s259 + $0xc0] sm:$0xff]
          %v342 = vld [vmem:[%s259 + $0xc8] sm:$0xff]
          %v343 = vld [vmem:[%s259 + $0xd0] sm:$0xff]
          %v344 = vld [vmem:[%s259 + $0xd8] sm:$0xff]
          %v345 = vld [vmem:[%s259 + $0xe0] sm:$0xff]
          %v346 = vld [vmem:[%s259 + $0xe8] sm:$0xff]
          %v347 = vld [vmem:[%s259 + $0xf0] sm:$0xff]
          %v348 = vld [vmem:[%s259 + $0xf8] sm:$0xff]
          %v349 = vld [vmem:[%s259 + $0x100] sm:$0xff]
          %v350 = vld [vmem:[%s259 + $0x108] sm:$0xff]
          %v351 = vld [vmem:[%s259 + $0x110] sm:$0xff]
          %v352 = vld [vmem:[%s259 + $0x118] sm:$0xff]
          %v353 = vld [vmem:[%s259 + $0x120] sm:$0xff]
          %v354 = vld [vmem:[%s259 + $0x128] sm:$0xff]
          %v355 = vld [vmem:[%s259 + $0x130] sm:$0xff]
          %v356 = vld [vmem:[%s259 + $0x138] sm:$0xff]
          %v357 = vld [vmem:[%s259 + $0x140] sm:$0xff]
          %v358 = vld [vmem:[%s259 + $0x148] sm:$0xff]
          %v359 = vld [vmem:[%s259 + $0x150] sm:$0xff]
          %v360 = vld [vmem:[%s259 + $0x158] sm:$0xff]
          %v361 = vld [vmem:[%s259 + $0x160] sm:$0xff]
          %v362 = vld [vmem:[%s259 + $0x168] sm:$0xff]
          %v363 = vld [vmem:[%s259 + $0x170] sm:$0xff]
          %v364 = vld [vmem:[%s259 + $0x178] sm:$0xff]
          %v365 = vld [vmem:[%s259 + $0x180] sm:$0xff]
          %v366 = vld [vmem:[%s259 + $0x188] sm:$0xff]
          %v367 = vld [vmem:[%s259 + $0x190] sm:$0xff]
          %v368 = vld [vmem:[%s259 + $0x198] sm:$0xff]
          %v369 = vld [vmem:[%s259 + $0x1a0] sm:$0xff]
          %v370 = vld [vmem:[%s259 + $0x1a8] sm:$0xff]
          %v371 = vld [vmem:[%s259 + $0x1b0] sm:$0xff]
          %v372 = vld [vmem:[%s259 + $0x1b8] sm:$0xff]
          %v373 = vld [vmem:[%s259 + $0x1c0] sm:$0xff]
          %v374 = vld [vmem:[%s259 + $0x1c8] sm:$0xff]
          %v375 = vld [vmem:[%s259 + $0x1d0] sm:$0xff]
          %v376 = vld [vmem:[%s259 + $0x1d8] sm:$0xff]
          %v377 = vld [vmem:[%s259 + $0x1e0] sm:$0xff]
          %v378 = vld [vmem:[%s259 + $0x1e8] sm:$0xff]
          %v379 = vld [vmem:[%s259 + $0x1f0] sm:$0xff]
          %v380 = vld [vmem:[%s259 + $0x1f8] sm:$0xff]
          %382 = vst [vmem:[#allocation1] ss:$4 sm:$0xff] %v316
          %v383 = vld.sshfl [vmem:[#allocation1] sm:$0xff pattern:$0x73625140]
          %v384 = vld.sshfl [vmem:[#allocation1 + $0x8] sm:$0xff pattern:$0x73625140]
          %v385 = vld.sshfl [vmem:[#allocation1 + $0x10] sm:$0xff pattern:$0x73625140]
          %v386 = vld.sshfl [vmem:[#allocation1 + $0x18] sm:$0xff pattern:$0x73625140]
          %391 = vmatpush.msra.mxu0 %v332
          %392 = vmatpush.msra.mxu0 %v331
          %393 = vmatpush.msra.mxu0 %v330
          %394 = vmatpush.msra.mxu0 %v329
          %395 = vmatpush.msra.mxu0 %v328
          %396 = vmatpush.msra.mxu0 %v327
          %397 = vmatpush.msra.mxu0 %v326
          %398 = vmatpush.msra.mxu0 %v325
          %399 = vmatpush.msra.mxu0 %v324
          %400 = vmatpush.msra.mxu0 %v323
          %401 = vmatpush.msra.mxu0 %v322
          %402 = vmatpush.msra.mxu0 %v321
          %403 = vmatpush.msra.mxu0 %v320
          %404 = vmatpush.msra.mxu0 %v319
          %405 = vmatpush.msra.mxu0 %v318
          %406 = vmatpush.msra.mxu0 %v317
          %407 = vmatmul.f32.gmra.mxu0 %v383
          %v408 = vpop.f32.mrf.mxu0
          %v409 = vadd.f32 0.0, %v408
          %410 = vdwg.mxu0
          %411 = vmatpush.msra.mxu0 %v348
          %412 = vmatpush.msra.mxu0 %v347
          %413 = vmatpush.msra.mxu0 %v346
          %414 = vmatpush.msra.mxu0 %v345
          %415 = vmatpush.msra.mxu0 %v344
          %416 = vmatpush.msra.mxu0 %v343
          %417 = vmatpush.msra.mxu0 %v342
          %418 = vmatpush.msra.mxu0 %v341
          %419 = vmatpush.msra.mxu0 %v340
          %420 = vmatpush.msra.mxu0 %v339
          %421 = vmatpush.msra.mxu0 %v338
          %422 = vmatpush.msra.mxu0 %v337
          %423 = vmatpush.msra.mxu0 %v336
          %424 = vmatpush.msra.mxu0 %v335
          %425 = vmatpush.msra.mxu0 %v334
          %426 = vmatpush.msra.mxu0 %v333
          %427 = vmatmul.f32.gmra.mxu0 %v384
          %v428 = vpop.f32.mrf.mxu0
          %v429 = vadd.f32 %v409, %v428
          %430 = vdwg.mxu0
          %431 = vmatpush.msra.mxu0 %v364
          %432 = vmatpush.msra.mxu0 %v363
          %433 = vmatpush.msra.mxu0 %v362
          %434 = vmatpush.msra.mxu0 %v361
          %435 = vmatpush.msra.mxu0 %v360
          %436 = vmatpush.msra.mxu0 %v359
          %437 = vmatpush.msra.mxu0 %v358
          %438 = vmatpush.msra.mxu0 %v357
          %439 = vmatpush.msra.mxu0 %v356
          %440 = vmatpush.msra.mxu0 %v355
          %441 = vmatpush.msra.mxu0 %v354
          %442 = vmatpush.msra.mxu0 %v353
          %443 = vmatpush.msra.mxu0 %v352
          %444 = vmatpush.msra.mxu0 %v351
          %445 = vmatpush.msra.mxu0 %v350
          %446 = vmatpush.msra.mxu0 %v349
          %447 = vmatmul.f32.gmra.mxu0 %v385
          %v448 = vpop.f32.mrf.mxu0
          %v449 = vadd.f32 %v429, %v448
          %450 = vdwg.mxu0
          %451 = vmatpush.msra.mxu0 %v380
          %452 = vmatpush.msra.mxu0 %v379
          %453 = vmatpush.msra.mxu0 %v378
          %454 = vmatpush.msra.mxu0 %v377
          %455 = vmatpush.msra.mxu0 %v376
          %456 = vmatpush.msra.mxu0 %v375
          %457 = vmatpush.msra.mxu0 %v374
          %458 = vmatpush.msra.mxu0 %v373
          %459 = vmatpush.msra.mxu0 %v372
          %460 = vmatpush.msra.mxu0 %v371
          %461 = vmatpush.msra.mxu0 %v370
          %462 = vmatpush.msra.mxu0 %v369
          %463 = vmatpush.msra.mxu0 %v368
          %464 = vmatpush.msra.mxu0 %v367
          %465 = vmatpush.msra.mxu0 %v366
          %466 = vmatpush.msra.mxu0 %v365
          %467 = vmatmul.f32.gmra.mxu0 %v386
          %v468 = vpop.f32.mrf.mxu0
          %v469 = vadd.f32 %v449, %v468
          %470 = vdwg.mxu0
          %v471 = vadd.f32 %v315, %v469
          %472 = vst [vmem:[%s290] sm:$0x3] %v471
        $region48: #{tpu_custom_call.1} parent=31 // pred_fallthru
          _
        %s473 = sand.u32 %s150, 1
        %s474 = scalar_lea.sflag [#allocation7], %s473
        %s475 = sand.u32 %s150, 1
        %s476 = smul.addr %s475, 2
        %s477 = scalar_lea.vmem [#allocation10], %s476
        // Predicated region
        $region49: #{tpu_custom_call.1} parent=31 // pred_check
          %p478 = pneg %p160
        $region50: #{tpu_custom_call.1} parent=31 // pred_check_branch
          %480 = sbr.rel (%p478) target = $region52
        $region51: #{tpu_custom_call.1} parent=31 // pred_region
          %482 = vsyncadd %s474, 0
          %s483 = smul.addr %s42, 2
          %s484 = scalar_lea.hbm %s5, %s483
          %s486 = sshll.u32 %s477, 4
          %s487 = int_to_ptr.vmem [resolvable:$true] %s486
          %s488 = sshll.u32 %s484, 4
          %s489 = int_to_ptr.hbm [resolvable:$true] %s488
          %491 = dma.vmem_to_hbm [thread:$0]  %s487, 32, %s489, %s474
        $region52: #{tpu_custom_call.1} parent=31 // pred_fallthru
          _
      $region32: #{tpu_custom_call.1} parent=5 // pred_fallthru
        _
      %p492 = scmp.le.s32.totalorder 2, %s33
      // Predicated region
      $region53: #{tpu_custom_call.1} parent=5 // pred_check
        %p493 = pneg %p492
      $region54: #{tpu_custom_call.1} parent=5 // pred_check_branch
        %495 = sbr.rel (%p493) target = $region56
      $region55: #{tpu_custom_call.1} parent=5 // pred_region
        %s496 = ssub.s32 %s33, 2
        // Predicated region
        $region57: #{tpu_custom_call.1} parent=55 // pred_check
          %p497 = pneg %p166
        $region58: #{tpu_custom_call.1} parent=55 // pred_check_branch
          %499 = sbr.rel (%p497) target = $region60
        $region59: #{tpu_custom_call.1} parent=55 // pred_region
          %s500 = sand.u32 %s151, 1
          %s501 = scalar_lea.sflag [#allocation7], %s500
          %s502 = sand.u32 %s151, 1
          %s503 = smul.addr %s502, 2
          %s504 = scalar_lea.vmem [#allocation10], %s503
          %506 = dma.done %s501, 32
        $region60: #{tpu_custom_call.1} parent=55 // pred_fallthru
          _
      $region56: #{tpu_custom_call.1} parent=5 // pred_fallthru
        _
    $region6: #{tpu_custom_call.1} parent=1 // loop_footer
      %s37 = sadd.s32 1, %s33
    $region7: #{tpu_custom_call.1} parent=1 // loop_footer_branch
      %32 = sbr.rel target = $region3
    $region8: #{tpu_custom_call.1} parent=1 // loop_exit
      _
    %507 = vsyncpa [#allocation6], 1
    %s508 = scalar_lea.sflag [#allocation6], 1
    %509 = vsyncpa %s508, 1
    %510 = vsyncpa [#allocation9], 1
    %s511 = scalar_lea.sflag [#allocation9], 1
    %512 = vsyncpa %s511, 1
    %513 = vsyncpa [#allocation7], 1
    %s514 = scalar_lea.sflag [#allocation7], 1
    %515 = vsyncpa %s514, 1

</llo_original>
